<compile_context>
chip_gen: v7x
topology: tpu7x:2x2x1
jax: 0.10.0
libtpu: 0.0.40
codegen_flags: <defaults>
</compile_context>

<pallas_src>
import functools

import jax
import jax.numpy as jnp
from jax.experimental import pallas as pl
from jax.experimental.pallas import tpu as pltpu

_NEG_BIG = -1.0e30  # padding value for the vocab axis (exp underflows to 0 in f32)


def _ce_kernel(len_ref, x_ref, y_ref, out_ref, m_sc, s_sc, tgt_sc, *, tile_t, tile_v):
    """Grid = (B, nT, nV), V innermost.

    len_ref: (B,)          i32 SMEM (scalar-prefetched lengths)
    x_ref:   (1, tT, tV)   logits tile (native dtype, cast to f32 in-kernel)
    y_ref:   (1, tT, 1)    i32 targets tile (sublane-major)
    out_ref: (1, tT, 1)    f32 per-token masked loss (written on last V tile)
    m_sc, s_sc, tgt_sc: (tT, 1) f32 VMEM scratch (online logsumexp + target logit)
    """
    b = pl.program_id(0)
    t = pl.program_id(1)
    v = pl.program_id(2)
    n_v = pl.num_programs(2)

    seq_valid = len_ref[b] - 1          # number of valid tokens for this sequence
    t_start = t * tile_t
    active = t_start < seq_valid        # this T tile has at least one valid token

    @pl.when(active)
    def _():
        @pl.when(v == 0)
        def _():
            m_sc[...] = jnp.full_like(m_sc, -jnp.inf)
            s_sc[...] = jnp.zeros_like(s_sc)
            tgt_sc[...] = jnp.zeros_like(tgt_sc)

        logits = x_ref[0].astype(jnp.float32)      # (tT, tV) f32 math, native-dtype load
        targets = y_ref[0]                         # (tT, 1) i32

        # Fused sweep: target-logit gather + online logsumexp update on the same tile.
        col = v * tile_v + jax.lax.broadcasted_iota(jnp.int32, (tile_t, tile_v), 1)
        is_tgt = col == targets                    # (tT, tV) bool
        tgt_sc[...] = tgt_sc[...] + jnp.sum(
            jnp.where(is_tgt, logits, 0.0), axis=-1, keepdims=True)

        m_tile = jnp.max(logits, axis=-1, keepdims=True)          # (tT, 1)
        m_new = jnp.maximum(m_sc[...], m_tile)
        s_sc[...] = s_sc[...] * jnp.exp(m_sc[...] - m_new) + jnp.sum(
            jnp.exp(logits - m_new), axis=-1, keepdims=True)
        m_sc[...] = m_new

    @pl.when(v == n_v - 1)
    def _():
        row = t_start + jax.lax.broadcasted_iota(jnp.int32, (tile_t, 1), 0)
        mask = row < seq_valid                     # (tT, 1) bool

        @pl.when(active)
        def _():
            per_tok = (m_sc[...] + jnp.log(s_sc[...])) - tgt_sc[...]   # -log p[target]
            out_ref[0] = jnp.where(mask, per_tok, 0.0)

        @pl.when(jnp.logical_not(active))
        def _():
            out_ref[0] = jnp.zeros_like(out_ref[0])


def _round_up(a, b):
    return (a + b - 1) // b * b


def custom_loss(x, y, lengths, *, tile_t=256, tile_v=2048):
    """Returns the same scalar as CustomLoss.forward(x, y, lengths) (i.e. self.loss).

    x: (B, T, V) float logits (bf16 or f32 — passed through in native dtype)
    y: (B, T) int class indices; lengths: (B,) int.
    """
    B, T, V = x.shape
    tT = min(tile_t, _round_up(T, 8))
    tV = min(tile_v, _round_up(V, 128))
    T_pad = _round_up(T, tT)
    V_pad = _round_up(V, tV)

    if T_pad != T or V_pad != V:
        # Pad vocab (and time) with a very negative value so padded classes
        # contribute nothing to the logsumexp; padded timesteps are masked anyway.
        x = jnp.pad(x, ((0, 0), (0, T_pad - T), (0, V_pad - V)),
                    constant_values=_NEG_BIG)
    if T_pad != T:
        y = jnp.pad(y, ((0, 0), (0, T_pad - T)))

    y3 = y.reshape(B, T_pad, 1).astype(jnp.int32)     # sublane-major targets
    lengths = lengths.astype(jnp.int32)

    nT = T_pad // tT
    nV = V_pad // tV

    def x_map(b, t, v, lens):
        # Dedupe DMAs on fully-padded T tiles: point them all at block (b, 0, 0)
        # so consecutive padding steps skip the copy (compute is skipped in-kernel).
        act = (t * tT) < (lens[b] - 1)
        return (b, jnp.where(act, t, 0), jnp.where(act, v, 0))

    def y_map(b, t, v, lens):
        return (b, t, 0)

    def out_map(b, t, v, lens):
        return (b, t, 0)

    kernel = functools.partial(_ce_kernel, tile_t=tT, tile_v=tV)

    # VMEM budget: logits double-buffered + small (tT, lane-padded) buffers/scratch.
    itemsize = jnp.dtype(x.dtype).itemsize
    est = 2 * tT * tV * itemsize + 8 * tT * 128 * 4
    vmem_limit = int(min(max(2 * est, 32 * 1024 * 1024), 48 * 1024 * 1024))  # v7x-safe

    per_token = pl.pallas_call(
        kernel,
        out_shape=jax.ShapeDtypeStruct((B, T_pad, 1), jnp.float32),
        grid_spec=pltpu.PrefetchScalarGridSpec(
            num_scalar_prefetch=1,
            grid=(B, nT, nV),
            in_specs=[
                pl.BlockSpec((1, tT, tV), x_map),   # logits tile (native dtype)
                pl.BlockSpec((1, tT, 1), y_map),    # targets tile
            ],
            out_specs=pl.BlockSpec((1, tT, 1), out_map),
            scratch_shapes=[pltpu.VMEM((tT, 1), jnp.float32)] * 3,  # m, s, tgt
        ),
        compiler_params=pltpu.CompilerParams(
            dimension_semantics=("parallel", "parallel", "arbitrary"),
            vmem_limit_bytes=vmem_limit,
        ),
    )(lengths, x, y3)

    # Final reduction in plain JAX (tiny: B*T_pad floats). Per-token losses are
    # already zero on masked/padded positions.
    n_tokens = jnp.sum(jnp.clip(lengths - 1, 0, T)).astype(jnp.float32)
    # Note: if every sequence has length <= 1, this divides by 0 -> NaN, matching
    # nn.CrossEntropyLoss() on an empty batch.
    return jnp.sum(per_token) / n_tokens


def _reference_loss(x, y, lengths):
    # pure-JAX reference of the same masked mean cross-entropy
    B, T, V = x.shape
    logp = jax.nn.log_softmax(x.astype(jnp.float32), axis=-1)
    tok_ll = jnp.take_along_axis(logp, y[..., None].astype(jnp.int32), axis=-1)[..., 0]
    t_idx = jnp.arange(T)[None, :]
    mask = (t_idx < (lengths[:, None] - 1)).astype(jnp.float32)
    return -(tok_ll * mask).sum() / mask.sum()


if __name__ == "__main__":
    key = jax.random.PRNGKey(0)
    B, T, V = 2, 8, 32
    kx, ky = jax.random.split(key)
    x = jax.random.normal(kx, (B, T, V), dtype=jnp.float32)
    y = jax.random.randint(ky, (B, T), 0, V, dtype=jnp.int32)
    lengths = jnp.array([6, 8], dtype=jnp.int32)   # uses first lengths[b]-1 steps

    # f32 path
    loss = custom_loss(x, y, lengths)
    jax.block_until_ready(loss)
    ref = _reference_loss(x, y, lengths)
    assert jnp.allclose(loss, ref, rtol=1e-5, atol=1e-5), (loss, ref)

    # bf16 native-dtype pass-through path (f32 math stays inside the kernel)
    x_bf16 = x.astype(jnp.bfloat16)
    loss_bf = custom_loss(x_bf16, y, lengths)
    jax.block_until_ready(loss_bf)
    ref_bf = _reference_loss(x_bf16.astype(jnp.float32), y, lengths)
    assert jnp.allclose(loss_bf, ref_bf, rtol=1e-3, atol=1e-3), (loss_bf, ref_bf)

    print("KERNEL_OK")
</pallas_src>

<mosaic_0001>
module attributes {stable_mosaic.version = 11 : i64} {
  func.func @_ce_kernel(%arg0: i32, %arg1: i32, %arg2: i32, %arg3: memref<2xi32, #tpu.memory_space<smem>>, %arg4: memref<1x8x128xf32, #tpu.memory_space<vmem>>, %arg5: memref<1x8x1xi32, #tpu.memory_space<vmem>>, %arg6: memref<1x8x1xf32, #tpu.memory_space<vmem>>, %arg7: memref<8x1xf32, #tpu.memory_space<vmem>>, %arg8: memref<8x1xf32, #tpu.memory_space<vmem>>, %arg9: memref<8x1xf32, #tpu.memory_space<vmem>>) attributes {dimension_semantics = [#tpu.dimension_semantics<parallel>, #tpu.dimension_semantics<parallel>, #tpu.dimension_semantics<arbitrary>], iteration_bounds = array<i64: 2, 1, 1>, scalar_prefetch = 1 : i64, scratch_operands = 3 : i64, tpu.core_type = #tpu.core_type<tc>, window_params = [{transform_indices = @transform_0, window_bounds = array<i64: 1, 8, 128>}, {transform_indices = @transform_1, window_bounds = array<i64: 1, 8, 1>}, {transform_indices = @transform_2, window_bounds = array<i64: 1, 8, 1>}]} {
    %0 = arith.index_cast %arg0 : i32 to index
    %1 = memref.load %arg3[%0] : memref<2xi32, #tpu.memory_space<smem>>
    %c1_i32 = arith.constant 1 : i32
    %2 = arith.subi %1, %c1_i32 : i32
    %c8_i32 = arith.constant 8 : i32
    %3 = arith.muli %arg1, %c8_i32 : i32
    %4 = arith.cmpi slt, %3, %2 : i32
    %5 = arith.extui %4 : i1 to i32
    %c0_i32 = arith.constant 0 : i32
    %6 = arith.cmpi ne, %5, %c0_i32 : i32
    scf.if %6 {
      %c0_i32_2 = arith.constant 0 : i32
      %10 = arith.cmpi eq, %arg2, %c0_i32_2 : i32
      %11 = arith.extui %10 : i1 to i32
      %c0_i32_3 = arith.constant 0 : i32
      %12 = arith.cmpi ne, %11, %c0_i32_3 : i32
      scf.if %12 {
        %cst_26 = arith.constant 0xFF800000 : f32
        %47 = vector.broadcast %cst_26 : f32 to vector<8x1xf32>
        %c0_27 = arith.constant 0 : index
        %c0_28 = arith.constant 0 : index
        %48 = vector.load %arg7[%c0_27, %c0_28] : memref<8x1xf32, #tpu.memory_space<vmem>>, vector<8x1xf32>
        tpu.vector_store %arg7[%c0_27, %c0_28], %47 {strides = array<i32>} : memref<8x1xf32, #tpu.memory_space<vmem>>, vector<8x1xf32>,
        %cst_29 = arith.constant 0.000000e+00 : f32
        %49 = vector.broadcast %cst_29 : f32 to vector<8x1xf32>
        %c0_30 = arith.constant 0 : index
        %c0_31 = arith.constant 0 : index
        %50 = vector.load %arg8[%c0_30, %c0_31] : memref<8x1xf32, #tpu.memory_space<vmem>>, vector<8x1xf32>
        tpu.vector_store %arg8[%c0_30, %c0_31], %49 {strides = array<i32>} : memref<8x1xf32, #tpu.memory_space<vmem>>, vector<8x1xf32>,
        %cst_32 = arith.constant 0.000000e+00 : f32
        %51 = vector.broadcast %cst_32 : f32 to vector<8x1xf32>
        %c0_33 = arith.constant 0 : index
        %c0_34 = arith.constant 0 : index
        %52 = vector.load %arg9[%c0_33, %c0_34] : memref<8x1xf32, #tpu.memory_space<vmem>>, vector<8x1xf32>
        tpu.vector_store %arg9[%c0_33, %c0_34], %51 {strides = array<i32>} : memref<8x1xf32, #tpu.memory_space<vmem>>, vector<8x1xf32>,
      } else {
      }
      %c0 = arith.constant 0 : index
      %c0_4 = arith.constant 0 : index
      %c0_5 = arith.constant 0 : index
      %13 = vector.load %arg4[%c0, %c0_4, %c0_5] : memref<1x8x128xf32, #tpu.memory_space<vmem>>, vector<1x8x128xf32>
      %14 = vector.shape_cast %13 : vector<1x8x128xf32> to vector<8x128xf32>
      %c0_6 = arith.constant 0 : index
      %c0_7 = arith.constant 0 : index
      %c0_8 = arith.constant 0 : index
      %15 = vector.load %arg5[%c0_6, %c0_7, %c0_8] : memref<1x8x1xi32, #tpu.memory_space<vmem>>, vector<1x8x1xi32>
      %16 = vector.shape_cast %15 : vector<1x8x1xi32> to vector<8x1xi32>
      %c128_i32 = arith.constant 128 : i32
      %17 = arith.muli %arg2, %c128_i32 : i32
      %18 = tpu.iota {dimensions = array<i32: 1>} : vector<8x128xi32>
      %19 = vector.broadcast %17 : i32 to vector<8x128xi32>
      %20 = arith.addi %19, %18 : vector<8x128xi32>
      %21 = vector.broadcast %16 : vector<8x1xi32> to vector<8x128xi32>
      %22 = arith.cmpi eq, %20, %21 : vector<8x128xi32>
      %c0_9 = arith.constant 0 : index
      %c0_10 = arith.constant 0 : index
      %23 = vector.load %arg9[%c0_9, %c0_10] : memref<8x1xf32, #tpu.memory_space<vmem>>, vector<8x1xf32>
      %cst = arith.constant 0.000000e+00 : f32
      %24 = vector.broadcast %cst : f32 to vector<8x128xf32>
      %25 = arith.select %22, %14, %24 : vector<8x128xi1>, vector<8x128xf32>
      %cst_11 = arith.constant dense<0.000000e+00> : vector<8xf32>
      %26 = vector.multi_reduction <add>, %25, %cst_11 [1] : vector<8x128xf32> to vector<8xf32>
      %27 = vector.shape_cast %26 : vector<8xf32> to vector<8x1xf32>
      %28 = arith.addf %23, %27 : vector<8x1xf32>
      %c0_12 = arith.constant 0 : index
      %c0_13 = arith.constant 0 : index
      %29 = vector.load %arg9[%c0_12, %c0_13] : memref<8x1xf32, #tpu.memory_space<vmem>>, vector<8x1xf32>
      tpu.vector_store %arg9[%c0_12, %c0_13], %28 {strides = array<i32>} : memref<8x1xf32, #tpu.memory_space<vmem>>, vector<8x1xf32>,
      %cst_14 = arith.constant dense<0xFF800000> : vector<8xf32>
      %30 = vector.multi_reduction <maximumf>, %14, %cst_14 [1] : vector<8x128xf32> to vector<8xf32>
      %31 = vector.shape_cast %30 : vector<8xf32> to vector<8x1xf32>
      %c0_15 = arith.constant 0 : index
      %c0_16 = arith.constant 0 : index
      %32 = vector.load %arg7[%c0_15, %c0_16] : memref<8x1xf32, #tpu.memory_space<vmem>>, vector<8x1xf32>
      %33 = arith.maximumf %32, %31 : vector<8x1xf32>
      %c0_17 = arith.constant 0 : index
      %c0_18 = arith.constant 0 : index
      %34 = vector.load %arg8[%c0_17, %c0_18] : memref<8x1xf32, #tpu.memory_space<vmem>>, vector<8x1xf32>
      %c0_19 = arith.constant 0 : index
      %c0_20 = arith.constant 0 : index
      %35 = vector.load %arg7[%c0_19, %c0_20] : memref<8x1xf32, #tpu.memory_space<vmem>>, vector<8x1xf32>
      %36 = arith.subf %35, %33 : vector<8x1xf32>
      %37 = math.exp %36 : vector<8x1xf32>
      %38 = arith.mulf %34, %37 : vector<8x1xf32>
      %39 = vector.broadcast %33 : vector<8x1xf32> to vector<8x128xf32>
      %40 = arith.subf %14, %39 : vector<8x128xf32>
      %41 = math.exp %40 : vector<8x128xf32>
      %cst_21 = arith.constant dense<0.000000e+00> : vector<8xf32>
      %42 = vector.multi_reduction <add>, %41, %cst_21 [1] : vector<8x128xf32> to vector<8xf32>
      %43 = vector.shape_cast %42 : vector<8xf32> to vector<8x1xf32>
      %44 = arith.addf %38, %43 : vector<8x1xf32>
      %c0_22 = arith.constant 0 : index
      %c0_23 = arith.constant 0 : index
      %45 = vector.load %arg8[%c0_22, %c0_23] : memref<8x1xf32, #tpu.memory_space<vmem>>, vector<8x1xf32>
      tpu.vector_store %arg8[%c0_22, %c0_23], %44 {strides = array<i32>} : memref<8x1xf32, #tpu.memory_space<vmem>>, vector<8x1xf32>,
      %c0_24 = arith.constant 0 : index
      %c0_25 = arith.constant 0 : index
      %46 = vector.load %arg7[%c0_24, %c0_25] : memref<8x1xf32, #tpu.memory_space<vmem>>, vector<8x1xf32>
      tpu.vector_store %arg7[%c0_24, %c0_25], %33 {strides = array<i32>} : memref<8x1xf32, #tpu.memory_space<vmem>>, vector<8x1xf32>,
    } else {
    }
    %c0_i32_0 = arith.constant 0 : i32
    %7 = arith.cmpi eq, %arg2, %c0_i32_0 : i32
    %8 = arith.extui %7 : i1 to i32
    %c0_i32_1 = arith.constant 0 : i32
    %9 = arith.cmpi ne, %8, %c0_i32_1 : i32
    scf.if %9 {
      %10 = tpu.iota {dimensions = array<i32: 0>} : vector<8x1xi32>
      %11 = vector.broadcast %3 : i32 to vector<8x1xi32>
      %12 = arith.addi %11, %10 : vector<8x1xi32>
      %13 = vector.broadcast %2 : i32 to vector<8x1xi32>
      %14 = arith.cmpi slt, %12, %13 : vector<8x1xi32>
      %15 = arith.extui %4 : i1 to i32
      %c0_i32_2 = arith.constant 0 : i32
      %16 = arith.cmpi ne, %15, %c0_i32_2 : i32
      scf.if %16 {
        %c0 = arith.constant 0 : index
        %c0_4 = arith.constant 0 : index
        %20 = vector.load %arg7[%c0, %c0_4] : memref<8x1xf32, #tpu.memory_space<vmem>>, vector<8x1xf32>
        %c0_5 = arith.constant 0 : index
        %c0_6 = arith.constant 0 : index
        %21 = vector.load %arg8[%c0_5, %c0_6] : memref<8x1xf32, #tpu.memory_space<vmem>>, vector<8x1xf32>
        %22 = math.log %21 : vector<8x1xf32>
        %23 = arith.addf %20, %22 : vector<8x1xf32>
        %c0_7 = arith.constant 0 : index
        %c0_8 = arith.constant 0 : index
        %24 = vector.load %arg9[%c0_7, %c0_8] : memref<8x1xf32, #tpu.memory_space<vmem>>, vector<8x1xf32>
        %25 = arith.subf %23, %24 : vector<8x1xf32>
        %cst = arith.constant 0.000000e+00 : f32
        %26 = vector.broadcast %cst : f32 to vector<8x1xf32>
        %27 = arith.select %14, %25, %26 : vector<8x1xi1>, vector<8x1xf32>
        %c0_9 = arith.constant 0 : index
        %c0_10 = arith.constant 0 : index
        %c0_11 = arith.constant 0 : index
        %28 = vector.load %arg6[%c0_9, %c0_10, %c0_11] : memref<1x8x1xf32, #tpu.memory_space<vmem>>, vector<1x8x1xf32>
        %29 = vector.shape_cast %28 : vector<1x8x1xf32> to vector<8x1xf32>
        %30 = vector.shape_cast %27 : vector<8x1xf32> to vector<1x8x1xf32>
        tpu.vector_store %arg6[%c0_9, %c0_10, %c0_11], %30 {strides = array<i32>} : memref<1x8x1xf32, #tpu.memory_space<vmem>>, vector<1x8x1xf32>,
      } else {
      }
      %true = arith.constant true
      %17 = arith.xori %4, %true : i1
      %18 = arith.extui %17 : i1 to i32
      %c0_i32_3 = arith.constant 0 : i32
      %19 = arith.cmpi ne, %18, %c0_i32_3 : i32
      scf.if %19 {
        %cst = arith.constant 0.000000e+00 : f32
        %20 = vector.broadcast %cst : f32 to vector<8x1xf32>
        %c0 = arith.constant 0 : index
        %c0_4 = arith.constant 0 : index
        %c0_5 = arith.constant 0 : index
        %21 = vector.load %arg6[%c0, %c0_4, %c0_5] : memref<1x8x1xf32, #tpu.memory_space<vmem>>, vector<1x8x1xf32>
        %22 = vector.shape_cast %21 : vector<1x8x1xf32> to vector<8x1xf32>
        %23 = vector.shape_cast %20 : vector<8x1xf32> to vector<1x8x1xf32>
        tpu.vector_store %arg6[%c0, %c0_4, %c0_5], %23 {strides = array<i32>} : memref<1x8x1xf32, #tpu.memory_space<vmem>>, vector<1x8x1xf32>,
      } else {
      }
    } else {
    }
    return
  }
  func.func @transform_0(%arg0: i32, %arg1: i32, %arg2: i32, %arg3: memref<2xi32, #tpu.memory_space<smem>>) -> (i32, i32, i32) {
    %c8_i32 = arith.constant 8 : i32
    %0 = arith.muli %arg1, %c8_i32 : i32
    %1 = arith.index_cast %arg0 : i32 to index
    %2 = memref.load %arg3[%1] : memref<2xi32, #tpu.memory_space<smem>>
    %c1_i32 = arith.constant 1 : i32
    %3 = arith.subi %2, %c1_i32 : i32
    %4 = arith.cmpi slt, %0, %3 : i32
    %c0_i32 = arith.constant 0 : i32
    %5 = arith.select %4, %arg1, %c0_i32 : i32
    %c0_i32_0 = arith.constant 0 : i32
    %6 = arith.select %4, %arg2, %c0_i32_0 : i32
    %c0_i32_1 = arith.constant 0 : i32
    return %arg0, %5, %6 : i32, i32, i32
  }
  func.func @transform_1(%arg0: i32, %arg1: i32, %arg2: i32, %arg3: memref<2xi32, #tpu.memory_space<smem>>) -> (i32, i32, i32) {
    %c0_i32 = arith.constant 0 : i32
    %c0_i32_0 = arith.constant 0 : i32
    return %arg0, %arg1, %c0_i32 : i32, i32, i32
  }
  func.func @transform_2(%arg0: i32, %arg1: i32, %arg2: i32, %arg3: memref<2xi32, #tpu.memory_space<smem>>) -> (i32, i32, i32) {
    %c0_i32 = arith.constant 0 : i32
    %c0_i32_0 = arith.constant 0 : i32
    return %arg0, %arg1, %c0_i32 : i32, i32, i32
  }
}

</mosaic_0001>

<llo_original>
// kernel: tpu_custom_call.1
$region0: #{tpu_custom_call.1}
  #allocation0 [shape = 'u32[]', space=smem, size = 0x4, offset = 0x4, fixed_abs, tag = 'smem constant byte address 0x4 - core index']
  #allocation1 [shape = 'u32[144,128]{1,0:T(1,128)}', space=vmem, size = 0x12000, scoped, tag = 'internal scratch']
  #allocation2 [shape = 'f32[8,1]{1,0:T(8,128)}', space=vmem, size = 0x1000, scoped, tag = 'scratch operand']
  #allocation3 [shape = 'f32[8,1]{1,0:T(8,128)}', space=vmem, size = 0x1000, scoped, tag = 'scratch operand']
  #allocation4 [shape = 'f32[8,1]{1,0:T(8,128)}', space=vmem, size = 0x1000, scoped, tag = 'scratch operand']
  #allocation5 [shape = 's32[1]{0}', space=sflag, size = 0x4, scoped, tag = 'scoped memory for tpu_custom_call.1']
  #allocation6 [shape = 'u8[512]{0}', space=smem, size = 0x200, scoped, tag = 'prefetched SMEM operand 0']
  %s0 = inlined_call_operand.vmem [shape: s32[2], index: 0, kind: input, shape index: {}]
  %s1 = inlined_call_operand.vmem [shape: f32[2,8,128], index: 1, kind: input, shape index: {}]
  %s2 = inlined_call_operand.vmem [shape: s32[2,8,1], index: 2, kind: input, shape index: {}]
  %s3 = inlined_call_operand.vmem [shape: f32[2,8,1], index: 3, kind: output, shape index: {}]
  %s4 = sld [smem:[#allocation0]]
  $region61: #{tpu_custom_call.1} parent=0
    _
  %s6 = ssub.s32 1, %s4
  %s7 = scalar_select 0, %s6, %s4
  %s8 = sshll.u32 %s0, 4
  %s9 = int_to_ptr.vmem [resolvable:$true] %s8
  %11 = dma.vmem_to_smem %s9, 16, [#allocation6], [#allocation5]
  %12 = dma.done [#allocation5], 16
  %13 = sfence
  loop: start=0, step=1, limit=4
  $region2: #{tpu_custom_call.1} parent=0 // loop_pre_header
    _
  $region3: #{tpu_custom_call.1} parent=0 // loop_header
    %s15 = sphi 0, %s19
    %p16 = scmp.ge.s32.totalorder %s15, 4
    %s22 = sphi 0, %s41
    %s23 = sphi 0, %s37
    %s24 = sphi 0, %s33
    %s25 = sphi 0, %s22
    %s26 = sphi 0, %s23
    %s27 = sphi 0, %s24
    %s28 = sphi 0, %s25
    %s29 = sphi 0, %s26
    %s30 = sphi 0, %s27
    %s60 = sphi 0, %s62
    %s63 = sphi 0, %s60
    %s64 = sphi 0, %s63
    %s80 = sphi 0, %s64
    %s88 = sphi 0, %s90
    %s91 = sphi 0, %s88
    %s92 = sphi 0, %s91
    %s108 = sphi 0, %s92
    %s116 = sphi 0, %s118
    %s119 = sphi 0, %s116
    %s120 = sphi 0, %s119
    %s136 = sphi 0, %s120
  $region4: #{tpu_custom_call.1} parent=0 // loop_header_branch
    %18 = sbr.rel (%p16) target = $region8
  $region5: #{tpu_custom_call.1} parent=0 // loop_body
    %s20 = ssub.s32 %s15, 1
    %s21 = ssub.s32 %s15, 2
    %s31 = sadd.s32 1, %s24
    %p32 = scmp.ge.s32.totalorder %s31, 1
    %s33 = scalar_select %p32, 0, %s31
    %s34 = sadd.s32 1, %s23
    %s35 = scalar_select %p32, %s34, %s23
    %p36 = scmp.ge.s32.totalorder %s35, 1
    %s37 = scalar_select %p36, 0, %s35
    %s38 = sadd.s32 1, %s22
    %s39 = scalar_select %p36, %s38, %s22
    %p40 = scmp.ge.s32.totalorder %s39, 2
    %s41 = scalar_select %p40, 0, %s39
    %s42 = smul.u32 %s23, 8
    %s43 = sld [smem:[#allocation6 + %s22]]
    %s44 = ssub.s32 %s43, 1
    %p45 = scmp.lt.s32.totalorder %s42, %s44
    %s46 = scalar_select %p45, %s23, 0
    %s47 = scalar_select %p45, %s24, 0
    %s48 = smul.u32 %s37, 8
    %s49 = sld [smem:[#allocation6 + %s41]]
    %s50 = ssub.s32 %s49, 1
    %p51 = scmp.lt.s32.totalorder %s48, %s50
    %s52 = scalar_select %p51, %s37, 0
    %s53 = scalar_select %p51, %s33, 0
    %s54 = ssub.s32 %s22, %s41
    %s55 = ssub.s32 %s46, %s52
    %s56 = sor.u32 %s54, %s55
    %s57 = ssub.s32 %s47, %s53
    %s58 = sor.u32 %s56, %s57
    %p59 = scmp.eq.s32.totalorder %s58, 0
    %s61 = sadd.s32 %s60, 1
    %s62 = scalar_select %p59, %s60, %s61
    %p65 = pneg %p59
    %p66 = scmp.eq.s32.totalorder %s15, 1
    %p67 = por %p65, %p66
    %p68 = scmp.ne.s32.totalorder %s60, %s63
    %p69 = scmp.eq.s32.totalorder %s15, 0
    %p70 = por %p68, %p69
    %p71 = scmp.ne.s32.totalorder %s60, %s63
    %p72 = scmp.eq.s32.totalorder %s20, 1
    %p73 = por %p71, %p72
    %p74 = scmp.ne.s32.totalorder %s63, %s64
    %p75 = scmp.eq.s32.totalorder %s20, 0
    %p76 = por %p74, %p75
    %p77 = scmp.ne.s32.totalorder %s63, %s64
    %p78 = scmp.eq.s32.totalorder %s21, 1
    %p79 = por %p77, %p78
    %p81 = scmp.ne.s32.totalorder %s64, %s80
    %p82 = scmp.eq.s32.totalorder %s21, 0
    %p83 = por %p81, %p82
    %s84 = ssub.s32 %s22, %s41
    %s85 = ssub.s32 %s23, %s37
    %s86 = sor.u32 %s84, %s85
    %p87 = scmp.eq.s32.totalorder %s86, 0
    %s89 = sadd.s32 %s88, 1
    %s90 = scalar_select %p87, %s88, %s89
    %p93 = pneg %p87
    %p94 = scmp.eq.s32.totalorder %s15, 1
    %p95 = por %p93, %p94
    %p96 = scmp.ne.s32.totalorder %s88, %s91
    %p97 = scmp.eq.s32.totalorder %s15, 0
    %p98 = por %p96, %p97
    %p99 = scmp.ne.s32.totalorder %s88, %s91
    %p100 = scmp.eq.s32.totalorder %s20, 1
    %p101 = por %p99, %p100
    %p102 = scmp.ne.s32.totalorder %s91, %s92
    %p103 = scmp.eq.s32.totalorder %s20, 0
    %p104 = por %p102, %p103
    %p105 = scmp.ne.s32.totalorder %s91, %s92
    %p106 = scmp.eq.s32.totalorder %s21, 1
    %p107 = por %p105, %p106
    %p109 = scmp.ne.s32.totalorder %s92, %s108
    %p110 = scmp.eq.s32.totalorder %s21, 0
    %p111 = por %p109, %p110
    %s112 = ssub.s32 %s22, %s41
    %s113 = ssub.s32 %s23, %s37
    %s114 = sor.u32 %s112, %s113
    %p115 = scmp.eq.s32.totalorder %s114, 0
    %s117 = sadd.s32 %s116, 1
    %s118 = scalar_select %p115, %s116, %s117
    %p121 = pneg %p115
    %p122 = scmp.eq.s32.totalorder %s15, 1
    %p123 = por %p121, %p122
    %p124 = scmp.ne.s32.totalorder %s116, %s119
    %p125 = scmp.eq.s32.totalorder %s15, 0
    %p126 = por %p124, %p125
    %p127 = scmp.ne.s32.totalorder %s116, %s119
    %p128 = scmp.eq.s32.totalorder %s20, 1
    %p129 = por %p127, %p128
    %p130 = scmp.ne.s32.totalorder %s119, %s120
    %p131 = scmp.eq.s32.totalorder %s20, 0
    %p132 = por %p130, %p131
    %p133 = scmp.ne.s32.totalorder %s119, %s120
    %p134 = scmp.eq.s32.totalorder %s21, 1
    %p135 = por %p133, %p134
    %p137 = scmp.ne.s32.totalorder %s120, %s136
    %p138 = scmp.eq.s32.totalorder %s21, 0
    %p139 = por %p137, %p138
    %p140 = scmp.le.s32.totalorder 1, %s15
    %p141 = scmp.lt.s32.totalorder %s15, 3
    %p142 = pnand %p140, %p141
    %p143 = pneg %p142
    // Predicated region
    $region9: #{tpu_custom_call.1} parent=5 // pred_check
      _
    $region10: #{tpu_custom_call.1} parent=5 // pred_check_branch
      %145 = sbr.rel (%p142) target = $region12
    $region11: #{tpu_custom_call.1} parent=5 // pred_region
      %s146 = ssub.s32 %s15, 1
    $region12: #{tpu_custom_call.1} parent=5 // pred_fallthru
      _
    %p147 = scmp.lt.s32.totalorder %s15, 2
    // Predicated region
    $region13: #{tpu_custom_call.1} parent=5 // pred_check
      %p148 = pneg %p147
    $region14: #{tpu_custom_call.1} parent=5 // pred_check_branch
      %150 = sbr.rel (%p148) target = $region16
    $region15: #{tpu_custom_call.1} parent=5 // pred_region
      // Predicated region
      $region17: #{tpu_custom_call.1} parent=15 // pred_check
        %p151 = pneg %p70
      $region18: #{tpu_custom_call.1} parent=15 // pred_check_branch
        %153 = sbr.rel (%p151) target = $region20
      $region19: #{tpu_custom_call.1} parent=15 // pred_region
        %s154 = smul.u32 %s23, 8
        %s155 = sld [smem:[#allocation6 + %s22]]
        %s156 = ssub.s32 %s155, 1
        %p157 = scmp.lt.s32.totalorder %s154, %s156
        %s158 = scalar_select %p157, %s23, 0
        %s159 = scalar_select %p157, %s24, 0
        %p160 = scmp.lt.s32.totalorder %s22, 1
        %s161 = scalar_select %p160, %s22, 1
        %p162 = scmp.lt.s32.totalorder %s158, 0
        %s163 = scalar_select %p162, %s158, 0
        %p164 = scmp.lt.s32.totalorder %s159, 0
        %s165 = scalar_select %p164, %s159, 0
        %s166 = sadd.s32 %s165, %s163
        %s167 = sadd.s32 %s166, %s161
        %s168 = smul.addr %s167, 8
        %s169 = scalar_lea.vmem %s1, %s168
        %s170 = smul.u32 %s23, 8
        %s171 = sld [smem:[#allocation6 + %s22]]
        %s172 = ssub.s32 %s171, 1
        %p173 = scmp.lt.s32.totalorder %s170, %s172
        %s174 = scalar_select %p173, %s23, 0
        %s175 = scalar_select %p173, %s24, 0
      $region20: #{tpu_custom_call.1} parent=15 // pred_fallthru
        _
      // Predicated region
      $region21: #{tpu_custom_call.1} parent=15 // pred_check
        %p176 = pneg %p98
      $region22: #{tpu_custom_call.1} parent=15 // pred_check_branch
        %178 = sbr.rel (%p176) target = $region24
      $region23: #{tpu_custom_call.1} parent=15 // pred_region
        %p179 = scmp.lt.s32.totalorder %s22, 1
        %s180 = scalar_select %p179, %s22, 1
        %p181 = scmp.lt.s32.totalorder %s23, 0
        %s182 = scalar_select %p181, %s23, 0
        %s183 = sadd.s32 %s182, %s180
        %s184 = smul.addr %s183, 8
        %s185 = scalar_lea.vmem %s2, %s184
      $region24: #{tpu_custom_call.1} parent=15 // pred_fallthru
        _
    $region16: #{tpu_custom_call.1} parent=5 // pred_fallthru
      _
    %p186 = scmp.le.s32.totalorder 1, %s15
    %p187 = scmp.lt.s32.totalorder %s15, 3
    %p188 = pnand %p186, %p187
    %p189 = pneg %p188
    // Predicated region
    $region25: #{tpu_custom_call.1} parent=5 // pred_check
      _
    $region26: #{tpu_custom_call.1} parent=5 // pred_check_branch
      %191 = sbr.rel (%p188) target = $region28
    $region27: #{tpu_custom_call.1} parent=5 // pred_region
      %s192 = ssub.s32 %s15, 1
      %s193 = smul.u32 %s26, 8
      %s194 = sld [smem:[#allocation6 + %s25]]
      %s195 = ssub.s32 %s194, 1
      %p196 = scmp.lt.s32.totalorder %s193, %s195
      %s197 = scalar_select %p196, %s26, 0
      %s198 = scalar_select %p196, %s27, 0
      %p199 = scmp.lt.s32.totalorder %s25, 1
      %s200 = scalar_select %p199, %s25, 1
      %p201 = scmp.lt.s32.totalorder %s197, 0
      %s202 = scalar_select %p201, %s197, 0
      %p203 = scmp.lt.s32.totalorder %s198, 0
      %s204 = scalar_select %p203, %s198, 0
      %s205 = sadd.s32 %s204, %s202
      %s206 = sadd.s32 %s205, %s200
      %s207 = smul.addr %s206, 8
      %s208 = scalar_lea.vmem %s1, %s207
      %p209 = pneg %p76
      %p210 = pneg %p73
      %p211 = scmp.lt.s32.totalorder %s25, 1
      %s212 = scalar_select %p211, %s25, 1
      %p213 = scmp.lt.s32.totalorder %s26, 0
      %s214 = scalar_select %p213, %s26, 0
      %s215 = sadd.s32 %s214, %s212
      %s216 = smul.addr %s215, 8
      %s217 = scalar_lea.vmem %s2, %s216
      %p218 = pneg %p104
      %p219 = pneg %p101
      %p220 = pneg %p132
      %p221 = pneg %p129
      %p222 = scmp.lt.s32.totalorder %s25, 1
      %s223 = scalar_select %p222, %s25, 1
      %p224 = scmp.lt.s32.totalorder %s26, 0
      %s225 = scalar_select %p224, %s26, 0
      %s226 = sadd.s32 %s225, %s223
      %s227 = smul.addr %s226, 8
      %s228 = scalar_lea.vmem %s3, %s227
      %s229 = smul.u32 %s26, 8
      %s230 = sld [smem:[#allocation6 + %s25]]
      %s231 = ssub.s32 %s230, 1
      %p232 = scmp.lt.s32.totalorder %s229, %s231
      %s233 = scalar_select %p232, %s26, 0
      %s234 = scalar_select %p232, %s27, 0
      %p235 = scmp.lt.s32.totalorder %s25, 1
      %s236 = scalar_select %p235, %s25, 1
      %p237 = scmp.lt.s32.totalorder %s233, 0
      %s238 = scalar_select %p237, %s233, 0
      %p239 = scmp.lt.s32.totalorder %s234, 0
      %s240 = scalar_select %p239, %s234, 0
      %s241 = sadd.s32 %s240, %s238
      %s242 = sadd.s32 %s241, %s236
      %s243 = smul.addr %s242, 8
      %s244 = scalar_lea.vmem %s1, %s243
      %s245 = smul.u32 %s26, 8
      %s246 = sld [smem:[#allocation6 + %s25]]
      %s247 = ssub.s32 %s246, 1
      %p248 = scmp.lt.s32.totalorder %s245, %s247
      %s249 = scalar_select %p248, %s26, 0
      %s250 = scalar_select %p248, %s27, 0
      %p251 = scmp.lt.s32.totalorder %s25, 1
      %s252 = scalar_select %p251, %s25, 1
      %p253 = scmp.lt.s32.totalorder %s26, 0
      %s254 = scalar_select %p253, %s26, 0
      %s255 = sadd.s32 %s254, %s252
      %s256 = smul.addr %s255, 8
      %s257 = scalar_lea.vmem %s2, %s256
      %p258 = scmp.lt.s32.totalorder %s25, 1
      %s259 = scalar_select %p258, %s25, 1
      %p260 = scmp.lt.s32.totalorder %s26, 0
      %s261 = scalar_select %p260, %s26, 0
      %s262 = sadd.s32 %s261, %s259
      %s263 = smul.addr %s262, 8
      %s264 = scalar_lea.vmem %s3, %s263
      %s265 = sld [smem:[#allocation6 + %s25]]
      %s266 = ssub.s32 %s265, 1
      %s267 = smul.u32 %s26, 8
      %p268 = scmp.lt.s32.totalorder %s267, %s266
      // Predicated region
      $region29: #{tpu_custom_call.1} parent=27 // pred_check
        %p269 = pneg %p268
      $region30: #{tpu_custom_call.1} parent=27 // pred_check_branch
        %271 = sbr.rel (%p269) target = $region32
      $region31: #{tpu_custom_call.1} parent=27 // pred_region
        %p272 = scmp.eq.s32.totalorder %s27, 0
        // Predicated region
        $region33: #{tpu_custom_call.1} parent=31 // pred_check
          %p273 = pneg %p272
        $region34: #{tpu_custom_call.1} parent=31 // pred_check_branch
          %275 = sbr.rel (%p273) target = $region36
        $region35: #{tpu_custom_call.1} parent=31 // pred_region
          %vm276 = vcmask 7168
          %277 = vst.msk [vmem:[#allocation2] sm:$0xff] %vm276, -inf
          %278 = vst.msk [vmem:[#allocation3] sm:$0xff] %vm276, 0.0
          %279 = vst.msk [vmem:[#allocation4] sm:$0xff] %vm276, 0.0
        $region36: #{tpu_custom_call.1} parent=31 // pred_fallthru
          _
        %v280 = vld [vmem:[%s244] sm:$0xff]
        %v281 = vld [vmem:[%s257] sm:$0xff]
        %s282 = smul.u32 %s27, 128
        %v283 = vlaneseq
        %v284 = vand.u32 %v283, 127
        %v285 = vstv %s282
        %v286 = vadd.s32 %v285, %v284
        %287 = vset.pattern.permute.xlu0 0
        %288 = vperm.xlu0 %287, %v281
        %v289 = vpop.permute.xlu0 %288
        %vm290 = vcmp.eq.s32.totalorder %v286, %v289
        %v291 = vld [vmem:[#allocation4] sm:$0xff]
        %v292 = vsel %vm290, %v280, 0.0
        %293 = vadd.xlane.f32.xlu0 %v292
        %v294 = vpop.xlane.xlu0 %293
        %v295 = vadd.f32 %v291, %v294
        %vm296 = vcmask 7168
        %297 = vst.msk [vmem:[#allocation4] sm:$0xff] %vm296, %v295
        %298 = vmax.xlane.f32.xlu0 %v280
        %v299 = vpop.xlane.xlu0 %298
        %v300 = vld [vmem:[#allocation2] sm:$0xff]
        %v301 = vmax.f32 %v300, %v299
        %v302 = vld [vmem:[#allocation3] sm:$0xff]
        %v303 = vsub.f32 %v300, %v301
        %v304 = vmul.f32 %v303, 1.442695
        %v305 = vpow.pop %v304
        %v306 = vmul.f32 %v302, %v305
        %308 = vset.pattern.permute.xlu0 0
        %309 = vperm.xlu0 %308, %v301
        %v310 = vpop.permute.xlu0 %309
        %v312 = vsub.f32 %v280, %v310
        %v313 = vmul.f32 %v312, 1.442695
        %v314 = vpow.pop %v313
        %315 = vadd.xlane.f32.xlu0 %v314
        %v316 = vpop.xlane.xlu0 %315
        %v317 = vadd.f32 %v306, %v316
        %318 = vst.msk [vmem:[#allocation3] sm:$0xff] %vm296, %v317
        %319 = vst.msk [vmem:[#allocation2] sm:$0xff] %vm296, %v301
      $region32: #{tpu_custom_call.1} parent=27 // pred_fallthru
        _
      %p320 = scmp.eq.s32.totalorder %s27, 0
      // Predicated region
      $region37: #{tpu_custom_call.1} parent=27 // pred_check
        %p321 = pneg %p320
      $region38: #{tpu_custom_call.1} parent=27 // pred_check_branch
        %323 = sbr.rel (%p321) target = $region40
      $region39: #{tpu_custom_call.1} parent=27 // pred_region
        %v324 = vlaneseq
        %v325 = vshrl.u32 %v324, 7
        %v326 = vstv %s267
        %v327 = vadd.s32 %v326, %v325
        %v328 = vstv %s266
        %vm329 = vcmp.lt.s32.totalorder %v327, %v328
        // Predicated region
        $region41: #{tpu_custom_call.1} parent=39 // pred_check
          %p330 = pneg %p268
        $region42: #{tpu_custom_call.1} parent=39 // pred_check_branch
          %332 = sbr.rel (%p330) target = $region44
        $region43: #{tpu_custom_call.1} parent=39 // pred_region
          %v333 = vld [vmem:[#allocation2] sm:$0xff]
          %v334 = vld [vmem:[#allocation3] sm:$0xff]
          %v335 = vlog2.pop %v334
          %v336 = vmul.f32 %v335, 0.6931472
          %v337 = vadd.f32 %v333, %v336
          %v338 = vld [vmem:[#allocation4] sm:$0xff]
          %v339 = vsub.f32 %v337, %v338
          %v340 = vsel %vm329, %v339, 0.0
          %vm341 = vcmask 7168
          %342 = vst.msk [vmem:[%s264] sm:$0xff] %vm341, %v340
        $region44: #{tpu_custom_call.1} parent=39 // pred_fallthru
          _
        %p343 = scmp.ge.s32.totalorder %s267, %s266
        // Predicated region
        $region45: #{tpu_custom_call.1} parent=39 // pred_check
          %p344 = pneg %p343
        $region46: #{tpu_custom_call.1} parent=39 // pred_check_branch
          %346 = sbr.rel (%p344) target = $region48
        $region47: #{tpu_custom_call.1} parent=39 // pred_region
          %vm347 = vcmask 7168
          %348 = vst.msk [vmem:[%s264] sm:$0xff] %vm347, 0.0
        $region48: #{tpu_custom_call.1} parent=39 // pred_fallthru
          _
      $region40: #{tpu_custom_call.1} parent=27 // pred_fallthru
        _
      %p349 = scmp.lt.s32.totalorder %s25, 1
      %s350 = scalar_select %p349, %s25, 1
      %p351 = scmp.lt.s32.totalorder %s26, 0
      %s352 = scalar_select %p351, %s26, 0
      %s353 = sadd.s32 %s352, %s350
      %s354 = smul.addr %s353, 8
      %s355 = scalar_lea.vmem %s3, %s354
      // Predicated region
      $region49: #{tpu_custom_call.1} parent=27 // pred_check
        %p356 = pneg %p129
      $region50: #{tpu_custom_call.1} parent=27 // pred_check_branch
        %358 = sbr.rel (%p356) target = $region52
      $region51: #{tpu_custom_call.1} parent=27 // pred_region
        _
      $region52: #{tpu_custom_call.1} parent=27 // pred_fallthru
        _
    $region28: #{tpu_custom_call.1} parent=5 // pred_fallthru
      _
    %p359 = scmp.le.s32.totalorder 2, %s15
    // Predicated region
    $region53: #{tpu_custom_call.1} parent=5 // pred_check
      %p360 = pneg %p359
    $region54: #{tpu_custom_call.1} parent=5 // pred_check_branch
      %362 = sbr.rel (%p360) target = $region56
    $region55: #{tpu_custom_call.1} parent=5 // pred_region
      %s363 = ssub.s32 %s15, 2
      // Predicated region
      $region57: #{tpu_custom_call.1} parent=55 // pred_check
        %p364 = pneg %p135
      $region58: #{tpu_custom_call.1} parent=55 // pred_check_branch
        %366 = sbr.rel (%p364) target = $region60
      $region59: #{tpu_custom_call.1} parent=55 // pred_region
        %p367 = scmp.lt.s32.totalorder %s28, 1
        %s368 = scalar_select %p367, %s28, 1
        %p369 = scmp.lt.s32.totalorder %s29, 0
        %s370 = scalar_select %p369, %s29, 0
        %s371 = sadd.s32 %s370, %s368
        %s372 = smul.addr %s371, 8
        %s373 = scalar_lea.vmem %s3, %s372
      $region60: #{tpu_custom_call.1} parent=55 // pred_fallthru
        _
    $region56: #{tpu_custom_call.1} parent=5 // pred_fallthru
      _
  $region6: #{tpu_custom_call.1} parent=0 // loop_footer
    %s19 = sadd.s32 1, %s15
  $region7: #{tpu_custom_call.1} parent=0 // loop_footer_branch
    %14 = sbr.rel target = $region3
  $region8: #{tpu_custom_call.1} parent=0 // loop_exit
    _

</llo_original>
